<compile_context>
chip_gen: v5e
topology: v5e:2x2
jax: 0.10.0
libtpu: 0.0.40
codegen_flags: <defaults>
</compile_context>

<pallas_src>
import jax
import jax.numpy as jnp
from jax.experimental import pallas as pl
from jax.experimental.pallas import tpu as pltpu


# ----------------------------------------------------------------------------
# Kernels
# ----------------------------------------------------------------------------
def _masked_avg_kernel(x_ref, keep_ref, o_ref):
    # x_ref:    (tb, S, td)  activations
    # keep_ref: (tb, 1, S)   lane-dense keep mask (1 = keep, 0 = masked), x.dtype
    # o_ref:    (tb, td)     lane-dense output block
    keep = keep_ref[...]
    # Masked sum over S as a batched MXU matvec: (tb,1,S) @ (tb,S,td) -> (tb,1,td).
    num3 = jnp.einsum(
        "bks,bsd->bkd", keep, x_ref[...],
        preferred_element_type=jnp.float32)
    # Kept count per row computed in-kernel (no extra HBM stream): exact lane
    # reduce over S.  Fully-masked rows give 0/0 = NaN (matches PyTorch).
    cnt3 = jnp.sum(keep, axis=2, keepdims=True, dtype=jnp.float32)   # (tb,1,1)
    # Exact divide, then squeeze the unit head dim via a size-1 reduce.
    o_ref[...] = jnp.sum(num3 / cnt3, axis=1).astype(o_ref.dtype)


def _mean_kernel(x_ref, o_ref):
    # mask=None path: plain mean over dim 1.  f32 accumulation without
    # materializing an f32 copy of the block (important for bf16 inputs).
    inv_s = 1.0 / x_ref.shape[1]
    o_ref[...] = (jnp.sum(x_ref[...], axis=1, dtype=jnp.float32)
                  * inv_s).astype(o_ref.dtype)


# ----------------------------------------------------------------------------
# Tiling / chip heuristics
# ----------------------------------------------------------------------------
def _round_up(n, m):
    return ((n + m - 1) // m) * m


def _sublane_gran(itemsize):
    # Sublane packing granularity for the (tb, *) output blocks.
    if itemsize >= 4:
        return 8
    if itemsize == 2:
        return 16
    return 32


def _tpu_limits():
    """(per-core VMEM capacity in bytes, #TensorCores per chip) -- best effort."""
    vmem_cap = 64 * 1024 * 1024          # conservative default (v7x-sized)
    try:
        info = pltpu.get_tpu_info()
        cap = getattr(info, "vmem_capacity_bytes", None)
        if cap:
            vmem_cap = int(cap)
    except Exception:
        pass
    n_cores = 1
    try:
        kind = jax.devices()[0].device_kind.lower()
        if "v7" in kind or "7x" in kind:
            n_cores = 2
            vmem_cap = min(vmem_cap, 64 * 1024 * 1024)   # 64 MiB / TC on v7x
    except Exception:
        pass
    return vmem_cap, n_cores


def _choose_tiles(B, S, D, itemsize, gran, vmem_cap, n_cores):
    """Pick (tb, td) so the grid divides evenly (no x padding) and blocks fit VMEM."""
    # Per-x-buffer budget: double-buffered x dominates scoped VMEM; keep/out
    # streams and intermediates get the remaining headroom.  Blocks of a few
    # MiB already amortize the ~0.35us/step overhead, so cap at 16 MiB.
    limit_cap = int(vmem_cap * 0.7)
    x_budget = max(2 * 1024 * 1024, (limit_cap - 4 * 1024 * 1024) // 2)
    x_budget = min(x_budget, 16 * 1024 * 1024)

    # ---- lane tile over D: largest multiple-of-128 divisor of D such that a
    # gran-row block fits the budget (or D itself when D isn't 128-aligned).
    td = D
    if D % 128 == 0:
        best = 128
        cand = 128
        while cand <= D:
            if D % cand == 0 and S * cand * itemsize * gran <= x_budget:
                best = cand
            cand += 128
        td = best

    # ---- batch tile: full batch, or a divisor of B that is a multiple of gran.
    row_bytes = S * td * itemsize
    max_tb = max(1, x_budget // max(row_bytes, 1))
    if B <= max_tb:
        tb = B
    else:
        tb = None
        t = (max_tb // gran) * gran
        while t >= gran:
            if B % t == 0:
                tb = t
                break
            t -= gran
        if tb is None:
            # Ragged fallback (rare: large B with no gran-aligned divisor that
            # fits); the wrapper pads the batch axis in this case only.
            # TODO(synk): use Pallas partial trailing blocks instead of padding.
            tb = max(gran, (max_tb // gran) * gran)

    # ---- v7x: 2 TensorCores per chip -- make sure the parallel grid has at
    # least 2 steps; on 1-TC chips one maximal block is best.
    if n_cores >= 2:
        nb = -(-B // tb)
        nd = D // td
        if nb * nd < 2:
            if td % 256 == 0:
                td //= 2                                   # still a 128-mult divisor
            elif B % 2 == 0 and (B // 2) % gran == 0:
                tb = B // 2
    return tb, td


def _vmem_limit(tb, S, td, itemsize, gran, masked, vmem_cap):
    """Scoped-VMEM limit derived from the actual block footprints."""
    lanes = lambda n: _round_up(n, 128)
    x_blk = tb * _round_up(S, gran) * lanes(td) * itemsize
    out_blk = _round_up(tb, gran) * lanes(td) * itemsize
    keep_blk = tb * gran * lanes(S) * itemsize if masked else 0
    need = 2 * (x_blk + out_blk + keep_blk)        # double-buffered streams
    need += 2 * tb * lanes(td) * 4                 # f32 matvec result / temporaries
    need += 2 * 1024 * 1024                        # compiler scratch slack
    limit = max(32 * 1024 * 1024, need)
    return int(min(limit, int(vmem_cap * 0.9)))


# ----------------------------------------------------------------------------
# Wrapper: GlobalAvg1D.forward(x, mask)
# ----------------------------------------------------------------------------
def global_avg_1d(x, mask=None, *, block_b=None, block_d=None):
    """Pallas equivalent of GlobalAvg1D.forward(x, mask).

    x: (B, S, D); mask: optional (B, S) bool, True == excluded. Returns (B, D).
    block_b / block_d are test-only tiling overrides.
    """
    B, S, D = x.shape
    itemsize = jnp.dtype(x.dtype).itemsize
    gran = _sublane_gran(itemsize)
    vmem_cap, n_cores = _tpu_limits()

    tb, td = _choose_tiles(B, S, D, itemsize, gran, vmem_cap, n_cores)
    if block_d is not None:
        td = int(block_d)
        assert D % td == 0 and (td == D or td % 128 == 0)
    if block_b is not None:
        tb = int(block_b)
        assert tb == B or tb % 8 == 0

    nb = int(pl.cdiv(B, tb))
    nd = D // td
    Bp = nb * tb
    pad = Bp - B                                   # 0 in the normal path

    limit = _vmem_limit(tb, S, td, itemsize, gran, mask is not None, vmem_cap)
    cparams = pltpu.CompilerParams(
        dimension_semantics=("parallel", "parallel"),
        vmem_limit_bytes=limit,
    )

    xin = x if pad == 0 else jnp.pad(x, ((0, pad), (0, 0), (0, 0)))

    if mask is None:
        out = pl.pallas_call(
            _mean_kernel,
            out_shape=jax.ShapeDtypeStruct((Bp, D), x.dtype),
            grid=(nb, nd),
            in_specs=[pl.BlockSpec((tb, S, td), lambda b, d: (b, 0, d))],
            out_specs=pl.BlockSpec((tb, td), lambda b, d: (b, d)),
            compiler_params=cparams,
        )(xin)
        return out[:B] if pad else out

    # Lane-dense keep mask (1 = keep) in x's dtype; tiny vs. x, reused over nd.
    keep = (~mask).astype(x.dtype)[:, None, :]                 # (B, 1, S)
    if pad:
        keep = jnp.pad(keep, ((0, pad), (0, 0), (0, 0)), constant_values=1)

    out = pl.pallas_call(
        _masked_avg_kernel,
        out_shape=jax.ShapeDtypeStruct((Bp, D), x.dtype),
        grid=(nb, nd),
        in_specs=[
            pl.BlockSpec((tb, S, td), lambda b, d: (b, 0, d)),
            pl.BlockSpec((tb, 1, S), lambda b, d: (b, 0, 0)),
        ],
        out_specs=pl.BlockSpec((tb, td), lambda b, d: (b, d)),
        compiler_params=cparams,
    )(xin, keep)
    return out[:B] if pad else out


# ----------------------------------------------------------------------------
# Reference + tests
# ----------------------------------------------------------------------------
def _reference(x, mask=None):
    if mask is None:
        return jnp.mean(x, axis=1)
    keep = (~mask).astype(jnp.float32)[..., None]
    return jnp.sum(x * keep, axis=1) / jnp.sum(keep, axis=1)


if __name__ == "__main__":
    key = jax.random.PRNGKey(0)
    kx, km, kx2, km2, kx3, km3 = jax.random.split(key, 6)

    # (batch, seq, d_model) pooling input as produced by the transformer encoder.
    B, S, D = 2, 8, 32
    x = jax.random.normal(kx, (B, S, D), dtype=jnp.float32)
    mask = jax.random.bernoulli(km, p=0.3, shape=(B, S))
    mask = mask.at[:, 0].set(False)          # at least one kept position per row

    # No-mask path (plain mean over dim 1).
    out_nomask = jax.block_until_ready(global_avg_1d(x, None))
    assert out_nomask.shape == (B, D)
    assert jnp.allclose(out_nomask, _reference(x, None), atol=1e-5, rtol=1e-5)

    # Masked path.
    out_masked = jax.block_until_ready(global_avg_1d(x, mask))
    assert out_masked.shape == (B, D)
    assert jnp.allclose(out_masked, _reference(x, mask), atol=1e-5, rtol=1e-5)

    # Larger case: default tiling keeps B=20 as one full-batch block (no pad).
    B2, S2, D2 = 20, 16, 128
    x2 = jax.random.normal(kx2, (B2, S2, D2), dtype=jnp.float32)
    mask2 = jax.random.bernoulli(km2, p=0.3, shape=(B2, S2))
    mask2 = mask2.at[:, 0].set(False)
    out2 = jax.block_until_ready(global_avg_1d(x2, mask2))
    assert out2.shape == (B2, D2)
    assert jnp.allclose(out2, _reference(x2, mask2), atol=1e-5, rtol=1e-5)

    # Multi-block grid on both axes (batch tiles x D tiles) via test overrides;
    # B3 % block_b == 0 and D3 % block_d == 0, so no padding anywhere.
    B3, S3, D3 = 32, 24, 256
    x3 = jax.random.normal(kx3, (B3, S3, D3), dtype=jnp.float32)
    mask3 = jax.random.bernoulli(km3, p=0.3, shape=(B3, S3))
    mask3 = mask3.at[:, 0].set(False)
    out3 = jax.block_until_ready(global_avg_1d(x3, mask3, block_b=8, block_d=128))
    assert out3.shape == (B3, D3)
    assert jnp.allclose(out3, _reference(x3, mask3), atol=1e-5, rtol=1e-5)

    # Ragged-batch fallback path (block does not divide B), exercised via the
    # override; only triggers padding in this rare configuration.
    out4 = jax.block_until_ready(global_avg_1d(x2, mask2, block_b=8))
    assert out4.shape == (B2, D2)
    assert jnp.allclose(out4, _reference(x2, mask2), atol=1e-5, rtol=1e-5)

    print("KERNEL_OK")
</pallas_src>

<mosaic_0001>
module attributes {stable_mosaic.version = 11 : i64} {
  func.func @_mean_kernel(%arg0: i32, %arg1: i32, %arg2: memref<2x8x32xf32, #tpu.memory_space<vmem>>, %arg3: memref<2x32xf32, #tpu.memory_space<vmem>>) attributes {dimension_semantics = [#tpu.dimension_semantics<parallel>, #tpu.dimension_semantics<parallel>], iteration_bounds = array<i64: 1, 1>, scalar_prefetch = 0 : i64, scratch_operands = 0 : i64, tpu.core_type = #tpu.core_type<tc>, window_params = [{transform_indices = @transform_0, window_bounds = array<i64: 2, 8, 32>}, {transform_indices = @transform_1, window_bounds = array<i64: 2, 32>}]} {
    %c0 = arith.constant 0 : index
    %c0_0 = arith.constant 0 : index
    %c0_1 = arith.constant 0 : index
    %0 = vector.load %arg2[%c0, %c0_0, %c0_1] : memref<2x8x32xf32, #tpu.memory_space<vmem>>, vector<2x8x32xf32>
    %cst = arith.constant dense<0.000000e+00> : vector<2x32xf32>
    %1 = vector.multi_reduction <add>, %0, %cst [1] : vector<2x8x32xf32> to vector<2x32xf32>
    %cst_2 = arith.constant 1.250000e-01 : f32
    %2 = vector.broadcast %cst_2 : f32 to vector<2x32xf32>
    %3 = arith.mulf %1, %2 : vector<2x32xf32>
    %c0_3 = arith.constant 0 : index
    %c0_4 = arith.constant 0 : index
    %4 = vector.load %arg3[%c0_3, %c0_4] : memref<2x32xf32, #tpu.memory_space<vmem>>, vector<2x32xf32>
    tpu.vector_store %arg3[%c0_3, %c0_4], %3 {strides = array<i32>} : memref<2x32xf32, #tpu.memory_space<vmem>>, vector<2x32xf32>,
    return
  }
  func.func @transform_0(%arg0: i32, %arg1: i32) -> (i32, i32, i32) {
    %c0_i32 = arith.constant 0 : i32
    %c0_i32_0 = arith.constant 0 : i32
    return %arg0, %c0_i32, %arg1 : i32, i32, i32
  }
  func.func @transform_1(%arg0: i32, %arg1: i32) -> (i32, i32) {
    %c0_i32 = arith.constant 0 : i32
    return %arg0, %arg1 : i32, i32
  }
}

</mosaic_0001>

<llo_original>
// kernel: tpu_custom_call.1
$region0: #{tpu_custom_call.1}
  #allocation0 [shape = 'u32[]', space=smem, size = 0x4, offset = 0x4, fixed_abs, tag = 'smem constant byte address 0x4 - core index']
  #allocation1 [shape = 'u32[72,128]{1,0:T(1,128)}', space=vmem, size = 0x9000, scoped, tag = 'internal scratch']
  %s0 = inlined_call_operand.hbm [shape: f32[2,8,32], index: 0, kind: input, shape index: {}]
  %s1 = inlined_call_operand.hbm [shape: f32[2,32], index: 1, kind: output, shape index: {}]
  %s2 = sld [smem:[#allocation0]]
  $region18: #{tpu_custom_call.1} parent=0
    _
  %s4 = ssub.s32 1, %s2
  %s5 = scalar_select 0, %s4, %s2
  $region1: #{tpu_custom_call.1} parent=0
    #allocation2 [shape = 'u8[8192]{0}', space=vmem, size = 0x2000, scoped, tag = 'input window, operand 0, single buffered']
    #allocation3 [shape = 's32[1]{0}', space=sflag, size = 0x4, scoped, tag = 'scoped memory for tpu_custom_call.1']
    #allocation4 [shape = 's32[1]{0}', space=sflag, size = 0x4, scoped, tag = 'scoped memory for tpu_custom_call.1']
    #allocation5 [shape = 'u8[1024]{0}', space=vmem, size = 0x400, scoped, tag = 'output window, operand 0, single buffered']
    %6 = vsyncpa [#allocation3], 0
    %7 = vsyncpa [#allocation4], 0
    // Predicated region
    $region2: #{tpu_custom_call.1} parent=1 // pred_check
      _
    $region3: #{tpu_custom_call.1} parent=1 // pred_check_branch
      %9 = sbr.rel (0) target = $region5
    $region4: #{tpu_custom_call.1} parent=1 // pred_region
      %11 = vsyncadd [#allocation3], 0
      %s12 = sshll.u32 %s0, 4
      %s13 = int_to_ptr.hbm [resolvable:$true] %s12
      %s14 = sshll.u32 [#allocation2], 4
      %s15 = int_to_ptr.vmem [resolvable:$true] %s14
      %20 = dma.hbm_to_vmem [thread:$0]  %s13, 256, %s15, [#allocation3], 128, 128, 8
    $region5: #{tpu_custom_call.1} parent=1 // pred_fallthru
      _
    // Predicated region
    $region6: #{tpu_custom_call.1} parent=1 // pred_check
      _
    $region7: #{tpu_custom_call.1} parent=1 // pred_check_branch
      %22 = sbr.rel (0) target = $region9
    $region8: #{tpu_custom_call.1} parent=1 // pred_region
      %24 = dma.done [#allocation3], 256
    $region9: #{tpu_custom_call.1} parent=1 // pred_fallthru
      _
    %v25 = vld [vmem:[#allocation2] sm:$0xff]
    %v26 = vld [vmem:[#allocation2 + $0x8] sm:$0xff]
    %vm27 = vcmask 261120
    %v28 = vsel %vm27, %v25, 0.0
    %v29 = vrot.slane %v28, 4
    %v30 = vadd.f32 %v28, %v29
    %v31 = vrot.slane %v30, 2
    %v32 = vadd.f32 %v30, %v31
    %v33 = vrot.slane %v32, 1
    %v34 = vadd.f32 %v32, %v33
    %v35 = vsel %vm27, %v26, 0.0
    %v36 = vrot.slane %v35, 4
    %v37 = vadd.f32 %v35, %v36
    %v38 = vrot.slane %v37, 2
    %v39 = vadd.f32 %v37, %v38
    %v40 = vrot.slane %v39, 1
    %v41 = vadd.f32 %v39, %v40
    %v42 = vmul.f32 %v34, 0.125
    %v43 = vmul.f32 %v41, 0.125
    %vm46 = vcmask 1041409
    %v47 = vsel %vm46, %v43, %v42
    %vm49 = vcmask 254976
    %50 = vst.msk [vmem:[#allocation5] sm:$0x3] %vm49, %v47
    // Predicated region
    $region10: #{tpu_custom_call.1} parent=1 // pred_check
      _
    $region11: #{tpu_custom_call.1} parent=1 // pred_check_branch
      %52 = sbr.rel (0) target = $region13
    $region12: #{tpu_custom_call.1} parent=1 // pred_region
      %54 = vsyncadd [#allocation4], 0
      %s56 = sshll.u32 [#allocation5], 4
      %s57 = int_to_ptr.vmem [resolvable:$true] %s56
      %s58 = sshll.u32 %s1, 4
      %s59 = int_to_ptr.hbm [resolvable:$true] %s58
      %61 = dma.vmem_to_hbm [thread:$0]  %s57, 32, %s59, [#allocation4]
    $region13: #{tpu_custom_call.1} parent=1 // pred_fallthru
      _
    // Predicated region
    $region14: #{tpu_custom_call.1} parent=1 // pred_check
      _
    $region15: #{tpu_custom_call.1} parent=1 // pred_check_branch
      %63 = sbr.rel (0) target = $region17
    $region16: #{tpu_custom_call.1} parent=1 // pred_region
      %65 = dma.done [#allocation4], 32
    $region17: #{tpu_custom_call.1} parent=1 // pred_fallthru
      _
    %66 = vsyncpa [#allocation3], 1
    %67 = vsyncpa [#allocation4], 1

</llo_original>
